<compile_context>
chip_gen: v6e
topology: v6e:2x2x1
jax: 0.10.0
libtpu: 0.0.40
codegen_flags: <defaults>
</compile_context>

<pallas_src>
from functools import partial

import jax
import jax.numpy as jnp
from jax.experimental import pallas as pl
from jax.experimental.pallas import tpu as pltpu


def _round_up(x, m):
    return ((x + m - 1) // m) * m


def _layernorm(x, g, b, eps):
    mu = jnp.mean(x, axis=-1, keepdims=True)
    var = jnp.mean((x - mu) ** 2, axis=-1, keepdims=True)
    return (x - mu) * jax.lax.rsqrt(var + eps) * g + b


def _default_vmem_limit():
    # v5e/v6e: 128 MiB physical -> cap at 96 MiB; v7x: 64 MiB -> ~48 MiB.
    try:
        cap = pltpu.get_tpu_info().vmem_capacity_bytes
        return int(min(96 * 1024 * 1024, (cap * 3) // 4))
    except Exception:
        return 48 * 1024 * 1024


# ---------------------------------------------------------------------------
# Pass 1: token mean over T + fc_norm LayerNorm  ->  query features (Q, H).
# hidden_states is streamed in (QB, TB, H) chunks; only a (QB, H) f32
# accumulator stays resident.
# ---------------------------------------------------------------------------
def query_feat_kernel(hs_ref, g_ref, b_ref, qf_ref, acc_scr, *, t_total, eps):
    t = pl.program_id(1)

    @pl.when(t == 0)
    def _init():
        acc_scr[...] = jnp.zeros_like(acc_scr)

    acc_scr[...] += jnp.sum(hs_ref[...].astype(jnp.float32), axis=1)

    @pl.when(t == pl.num_programs(1) - 1)
    def _finish():
        mean = acc_scr[...] * (1.0 / t_total)
        qf_ref[...] = _layernorm(mean, g_ref[...], b_ref[...], eps)


# ---------------------------------------------------------------------------
# Pass 2: concat query/support features, task-specific TransformerEncoder
# (post-LN, ReLU FFN), split + cosine similarity. Grid = (query blocks,
# layers); layer weights stream per layer, activations persist in VMEM.
# ---------------------------------------------------------------------------
def safsar_task_kernel(qf_ref, sup_ref,
                       wqkv_ref, bqkv_ref, wo_ref, w1_ref, b1_ref, w2_ref,
                       vec_ref,
                       out_ref, x_scr,
                       *, num_layers, num_heads, way, hidden, qb,
                       eps_ln=1e-5):
    f32 = jnp.float32
    bf16 = jnp.bfloat16
    S = 1 + way
    M = qb * S
    dh = hidden // num_heads
    scale = float(dh) ** -0.5
    l = pl.program_id(1)

    # ---- l == 0: build combined_features for this query block -------------
    @pl.when(l == 0)
    def _build_combined():
        qf = qf_ref[...].astype(f32)[:, None, :]                 # (QB, 1, H)
        sup = jnp.broadcast_to(sup_ref[...].astype(f32)[None],
                               (qb, way, hidden))                # (QB, WAY, H)
        x0 = jnp.concatenate([qf, sup], axis=1)                  # (QB, S, H)
        x_scr[...] = x0.reshape(M, hidden)

    # packed per-layer vectors: [bo, ln1g, ln1b, b2, ln2g, ln2b]
    vec = vec_ref[0]                                             # (6, H) f32
    bo, ln1g, ln1b, b2, ln2g, ln2b = (vec[i:i + 1] for i in range(6))

    x = x_scr[...]                                               # (M, H) f32

    # fused QKV projection (one wide matmul, one bias add)
    qkv = jnp.dot(x.astype(bf16), wqkv_ref[0],
                  preferred_element_type=f32) + bqkv_ref[0]      # (M, 3H)
    q = qkv[:, 0 * hidden:1 * hidden]
    k = qkv[:, 1 * hidden:2 * hidden]
    v = qkv[:, 2 * hidden:3 * hidden]

    # per-head attention -> full context, then a single K=H output projection
    ctx_heads = []
    for h in range(num_heads):                                   # small static unroll
        sl = slice(h * dh, (h + 1) * dh)
        qh = q[:, sl].reshape(qb, S, dh).astype(bf16)
        kh = k[:, sl].reshape(qb, S, dh).astype(bf16)
        vh = v[:, sl].reshape(qb, S, dh).astype(bf16)
        s = jnp.einsum('bqd,bkd->bqk', qh, kh,
                       preferred_element_type=f32) * scale       # (QB, S, S)
        s = s - jnp.max(s, axis=-1, keepdims=True)
        p = jnp.exp(s)
        p = p * pl.reciprocal(jnp.sum(p, axis=-1, keepdims=True), approx=True)
        ctx_heads.append(jnp.einsum('bqk,bkd->bqd', p.astype(bf16), vh,
                                    preferred_element_type=f32))  # (QB, S, dh)
    ctx = jnp.concatenate(ctx_heads, axis=-1).reshape(M, hidden)
    attn = jnp.dot(ctx.astype(bf16), wo_ref[0],
                   preferred_element_type=f32) + bo

    x = _layernorm(x + attn, ln1g, ln1b, eps_ln)

    ff = jnp.dot(x.astype(bf16), w1_ref[0],
                 preferred_element_type=f32) + b1_ref[0]
    ff = jnp.maximum(ff, 0.0)                                    # ReLU
    ff = jnp.dot(ff.astype(bf16), w2_ref[0],
                 preferred_element_type=f32) + b2

    x = _layernorm(x + ff, ln2g, ln2b, eps_ln)
    x_scr[...] = x

    # ---- last layer: split + cosine similarity, queries on lanes ----------
    @pl.when(l == num_layers - 1)
    def _finalize():
        x3 = x.reshape(qb, S, hidden)
        q_aug = x3[:, 0:1, :]                                    # (QB, 1, H)
        s_aug = x3[:, 1:, :]                                     # (QB, WAY, H)
        dots = jnp.sum(s_aug * q_aug, axis=-1)                   # (QB, WAY)
        qn = jnp.sqrt(jnp.sum(q_aug * q_aug, axis=-1))           # (QB, 1)
        sn = jnp.sqrt(jnp.sum(s_aug * s_aug, axis=-1))           # (QB, WAY)
        denom = jnp.maximum(qn * sn, 1e-8)
        sim = dots * pl.reciprocal(denom, approx=True)           # (QB, WAY)
        out_ref[0] = sim.T                                       # (WAY, QB)


def safsar_forward(hidden_states, support_feats, params, *, num_heads,
                   query_block=None, token_block=None):
    """hidden_states: (Q, T, H) f32; support_feats: (WAY, H) f32 -> (Q, WAY)."""
    Q, T, H = hidden_states.shape
    WAY = support_feats.shape[0]
    L = params["wq"].shape[0]
    S = 1 + WAY
    assert H % num_heads == 0

    # query block: multiple of 8 (sublane); 128 for large Q (MXU fill +
    # lane-dense output); for small Q keep >= 2 blocks for v7x megacore.
    if query_block is None:
        if Q >= 256:
            QB = 128
        else:
            QB = min(_round_up(max(1, (Q + 1) // 2), 8), _round_up(Q, 8))
    else:
        QB = _round_up(int(query_block), 8)
    n_blk = pl.cdiv(Q, QB)
    Qp = n_blk * QB

    hs = hidden_states
    if Qp != Q:
        hs = jnp.concatenate([hs, jnp.zeros((Qp - Q, T, H), hs.dtype)], axis=0)

    # token chunk for the prepass (~2 MiB per block), multiple of 8
    if token_block is None:
        tb_cap = max(8, (2 * 1024 * 1024) // max(1, QB * H * 4))
        TB = T if T <= tb_cap else (tb_cap // 8) * 8
    else:
        TB = int(token_block)
    n_t = pl.cdiv(T, TB)
    Tp = n_t * TB
    if Tp != T:
        hs = jnp.concatenate([hs, jnp.zeros((Qp, Tp - T, H), hs.dtype)], axis=1)

    vmem_limit = _default_vmem_limit()

    # ---- pass 1: token mean + fc_norm -> (Qp, H) ---------------------------
    qf = pl.pallas_call(
        partial(query_feat_kernel, t_total=T, eps=1e-12),
        out_shape=jax.ShapeDtypeStruct((Qp, H), jnp.float32),
        grid=(n_blk, n_t),
        in_specs=[pl.BlockSpec((QB, TB, H), lambda q, t: (q, t, 0)),
                  pl.BlockSpec((1, H), lambda q, t: (0, 0)),
                  pl.BlockSpec((1, H), lambda q, t: (0, 0))],
        out_specs=pl.BlockSpec((QB, H), lambda q, t: (q, 0)),
        scratch_shapes=[pltpu.VMEM((QB, H), jnp.float32)],
        compiler_params=pltpu.CompilerParams(
            dimension_semantics=("parallel", "arbitrary"),
            vmem_limit_bytes=vmem_limit),
    )(hs, params["fcn_g"], params["fcn_b"])

    # ---- pack per-layer weights: fused QKV + packed small vectors ----------
    wqkv = jnp.concatenate([params["wq"], params["wk"], params["wv"]], axis=-1)
    bqkv = jnp.concatenate([params["bq"], params["bk"], params["bv"]], axis=-1)
    vec = jnp.concatenate([params["bo"], params["ln1g"], params["ln1b"],
                           params["b2"], params["ln2g"], params["ln2b"]],
                          axis=1)                                # (L, 6, H)

    def layer_spec(shape):
        return pl.BlockSpec((1,) + tuple(shape[1:]),
                            lambda q, l: (l,) + (0,) * (len(shape) - 1))

    # ---- pass 2: task transformer + cosine similarity ----------------------
    out = pl.pallas_call(
        partial(safsar_task_kernel, num_layers=L, num_heads=num_heads,
                way=WAY, hidden=H, qb=QB),
        out_shape=jax.ShapeDtypeStruct((n_blk, WAY, QB), jnp.float32),
        grid=(n_blk, L),
        in_specs=[pl.BlockSpec((QB, H), lambda q, l: (q, 0)),
                  pl.BlockSpec((WAY, H), lambda q, l: (0, 0)),
                  layer_spec(wqkv.shape),
                  layer_spec(bqkv.shape),
                  layer_spec(params["wo"].shape),
                  layer_spec(params["w1"].shape),
                  layer_spec(params["b1"].shape),
                  layer_spec(params["w2"].shape),
                  layer_spec(vec.shape)],
        out_specs=pl.BlockSpec((1, WAY, QB), lambda q, l: (q, 0, 0)),
        scratch_shapes=[pltpu.VMEM((QB * S, H), jnp.float32)],
        compiler_params=pltpu.CompilerParams(
            dimension_semantics=("parallel", "arbitrary"),
            vmem_limit_bytes=vmem_limit),
    )(qf, support_feats, wqkv, bqkv, params["wo"], params["w1"],
      params["b1"], params["w2"], vec)

    # (n_blk, WAY, QB) -> (Q, WAY)
    sim = jnp.transpose(out, (0, 2, 1)).reshape(Qp, WAY)[:Q]
    return sim


def init_params(key, *, num_layers, hidden, intermediate):
    keys = jax.random.split(key, 8)
    ki = iter(range(len(keys)))

    def nrm(shape):
        # transformer weights in bf16 (f32 accumulation in-kernel)
        return (0.05 * jax.random.normal(keys[next(ki)], shape)).astype(jnp.bfloat16)

    L, H, I = num_layers, hidden, intermediate
    params = {
        "fcn_g": jnp.ones((1, H), jnp.float32),
        "fcn_b": jnp.zeros((1, H), jnp.float32),
        "wq": nrm((L, H, H)), "wk": nrm((L, H, H)),
        "wv": nrm((L, H, H)), "wo": nrm((L, H, H)),
        "bq": jnp.zeros((L, 1, H), jnp.float32),
        "bk": jnp.zeros((L, 1, H), jnp.float32),
        "bv": jnp.zeros((L, 1, H), jnp.float32),
        "bo": jnp.zeros((L, 1, H), jnp.float32),
        "ln1g": jnp.ones((L, 1, H), jnp.float32),
        "ln1b": jnp.zeros((L, 1, H), jnp.float32),
        "w1": nrm((L, H, I)),
        "b1": jnp.zeros((L, 1, I), jnp.float32),
        "w2": nrm((L, I, H)),
        "b2": jnp.zeros((L, 1, H), jnp.float32),
        "ln2g": jnp.ones((L, 1, H), jnp.float32),
        "ln2b": jnp.zeros((L, 1, H), jnp.float32),
    }
    return params


if __name__ == "__main__":
    # TODO(synk): VideoMAE / BERT backbones and the HF image processor have no
    # Pallas equivalent; their outputs are synthesized as kernel inputs here.
    Q, T, H = 10, 8, 32         # num_queries, backbone tokens, hidden_size
    WAY = 5                     # way (support classes)
    NUM_HEADS = 4
    INTERMEDIATE = 64
    NUM_LAYERS_TASK = 2

    key = jax.random.PRNGKey(0)
    k_hs, k_sup, k_par = jax.random.split(key, 3)

    hidden_states = jax.random.normal(k_hs, (Q, T, H), jnp.float32)  # backbone last hidden state
    ss_features = jax.random.normal(k_sup, (WAY, H), jnp.float32)    # precomputed support mm features
    params = init_params(k_par, num_layers=NUM_LAYERS_TASK,
                         hidden=H, intermediate=INTERMEDIATE)

    sim = safsar_forward(hidden_states, ss_features, params,
                         num_heads=NUM_HEADS)
    jax.block_until_ready(sim)
    assert sim.shape == (Q, WAY)
    assert bool(jnp.all(jnp.isfinite(sim)))
    print("KERNEL_OK")
</pallas_src>

<mosaic_0001>
module attributes {stable_mosaic.version = 11 : i64} {
  func.func @query_feat_kernel(%arg0: i32, %arg1: i32, %arg2: memref<8x8x32xf32, #tpu.memory_space<vmem>>, %arg3: memref<1x32xf32, #tpu.memory_space<vmem>>, %arg4: memref<1x32xf32, #tpu.memory_space<vmem>>, %arg5: memref<8x32xf32, #tpu.memory_space<vmem>>, %arg6: memref<8x32xf32, #tpu.memory_space<vmem>>) attributes {dimension_semantics = [#tpu.dimension_semantics<parallel>, #tpu.dimension_semantics<arbitrary>], iteration_bounds = array<i64: 2, 1>, scalar_prefetch = 0 : i64, scratch_operands = 1 : i64, tpu.core_type = #tpu.core_type<tc>, window_params = [{transform_indices = @transform_0, window_bounds = array<i64: 8, 8, 32>}, {pipeline_mode = #tpu.pipeline_mode<synchronous>, transform_indices = @transform_1, window_bounds = array<i64: 1, 32>}, {pipeline_mode = #tpu.pipeline_mode<synchronous>, transform_indices = @transform_2, window_bounds = array<i64: 1, 32>}, {transform_indices = @transform_3, window_bounds = array<i64: 8, 32>}]} {
    %c0_i32 = arith.constant 0 : i32
    %0 = arith.cmpi eq, %arg1, %c0_i32 : i32
    %1 = arith.extui %0 : i1 to i32
    %c0_i32_0 = arith.constant 0 : i32
    %2 = arith.cmpi ne, %1, %c0_i32_0 : i32
    scf.if %2 {
      %cst_9 = arith.constant 0.000000e+00 : f32
      %11 = vector.broadcast %cst_9 : f32 to vector<8x32xf32>
      %c0_10 = arith.constant 0 : index
      %c0_11 = arith.constant 0 : index
      %12 = vector.load %arg6[%c0_10, %c0_11] : memref<8x32xf32, #tpu.memory_space<vmem>>, vector<8x32xf32>
      tpu.vector_store %arg6[%c0_10, %c0_11], %11 {strides = array<i32>} : memref<8x32xf32, #tpu.memory_space<vmem>>, vector<8x32xf32>,
    } else {
    }
    %c0 = arith.constant 0 : index
    %c0_1 = arith.constant 0 : index
    %3 = vector.load %arg6[%c0, %c0_1] : memref<8x32xf32, #tpu.memory_space<vmem>>, vector<8x32xf32>
    %c0_2 = arith.constant 0 : index
    %c0_3 = arith.constant 0 : index
    %c0_4 = arith.constant 0 : index
    %4 = vector.load %arg2[%c0_2, %c0_3, %c0_4] : memref<8x8x32xf32, #tpu.memory_space<vmem>>, vector<8x8x32xf32>
    %cst = arith.constant dense<0.000000e+00> : vector<8x32xf32>
    %5 = vector.multi_reduction <add>, %4, %cst [1] : vector<8x8x32xf32> to vector<8x32xf32>
    %6 = arith.addf %3, %5 : vector<8x32xf32>
    %c0_5 = arith.constant 0 : index
    %c0_6 = arith.constant 0 : index
    %7 = vector.load %arg6[%c0_5, %c0_6] : memref<8x32xf32, #tpu.memory_space<vmem>>, vector<8x32xf32>
    tpu.vector_store %arg6[%c0_5, %c0_6], %6 {strides = array<i32>} : memref<8x32xf32, #tpu.memory_space<vmem>>, vector<8x32xf32>,
    %c0_i32_7 = arith.constant 0 : i32
    %8 = arith.cmpi eq, %arg1, %c0_i32_7 : i32
    %9 = arith.extui %8 : i1 to i32
    %c0_i32_8 = arith.constant 0 : i32
    %10 = arith.cmpi ne, %9, %c0_i32_8 : i32
    scf.if %10 {
      %c0_9 = arith.constant 0 : index
      %c0_10 = arith.constant 0 : index
      %11 = vector.load %arg6[%c0_9, %c0_10] : memref<8x32xf32, #tpu.memory_space<vmem>>, vector<8x32xf32>
      %cst_11 = arith.constant 1.250000e-01 : f32
      %12 = vector.broadcast %cst_11 : f32 to vector<8x32xf32>
      %13 = arith.mulf %11, %12 : vector<8x32xf32>
      %c0_12 = arith.constant 0 : index
      %c0_13 = arith.constant 0 : index
      %14 = vector.load %arg3[%c0_12, %c0_13] : memref<1x32xf32, #tpu.memory_space<vmem>>, vector<1x32xf32>
      %c0_14 = arith.constant 0 : index
      %c0_15 = arith.constant 0 : index
      %15 = vector.load %arg4[%c0_14, %c0_15] : memref<1x32xf32, #tpu.memory_space<vmem>>, vector<1x32xf32>
      %cst_16 = arith.constant dense<0.000000e+00> : vector<8xf32>
      %16 = vector.multi_reduction <add>, %13, %cst_16 [1] : vector<8x32xf32> to vector<8xf32>
      %17 = vector.shape_cast %16 : vector<8xf32> to vector<8x1xf32>
      %cst_17 = arith.constant 3.200000e+01 : f32
      %18 = vector.broadcast %cst_17 : f32 to vector<8x1xf32>
      %19 = arith.divf %17, %18 : vector<8x1xf32>
      %20 = vector.broadcast %19 : vector<8x1xf32> to vector<8x32xf32>
      %21 = arith.subf %13, %20 : vector<8x32xf32>
      %22 = arith.mulf %21, %21 : vector<8x32xf32>
      %cst_18 = arith.constant dense<0.000000e+00> : vector<8xf32>
      %23 = vector.multi_reduction <add>, %22, %cst_18 [1] : vector<8x32xf32> to vector<8xf32>
      %24 = vector.shape_cast %23 : vector<8xf32> to vector<8x1xf32>
      %cst_19 = arith.constant 3.200000e+01 : f32
      %25 = vector.broadcast %cst_19 : f32 to vector<8x1xf32>
      %26 = arith.divf %24, %25 : vector<8x1xf32>
      %27 = vector.broadcast %19 : vector<8x1xf32> to vector<8x32xf32>
      %28 = arith.subf %13, %27 : vector<8x32xf32>
      %cst_20 = arith.constant 9.99999996E-13 : f32
      %29 = vector.broadcast %cst_20 : f32 to vector<8x1xf32>
      %30 = arith.addf %26, %29 : vector<8x1xf32>
      %31 = math.rsqrt %30 : vector<8x1xf32>
      %32 = vector.broadcast %31 : vector<8x1xf32> to vector<8x32xf32>
      %33 = arith.mulf %28, %32 : vector<8x32xf32>
      %34 = vector.broadcast %14 : vector<1x32xf32> to vector<8x32xf32>
      %35 = arith.mulf %33, %34 : vector<8x32xf32>
      %36 = vector.broadcast %15 : vector<1x32xf32> to vector<8x32xf32>
      %37 = arith.addf %35, %36 : vector<8x32xf32>
      %c0_21 = arith.constant 0 : index
      %c0_22 = arith.constant 0 : index
      %38 = vector.load %arg5[%c0_21, %c0_22] : memref<8x32xf32, #tpu.memory_space<vmem>>, vector<8x32xf32>
      tpu.vector_store %arg5[%c0_21, %c0_22], %37 {strides = array<i32>} : memref<8x32xf32, #tpu.memory_space<vmem>>, vector<8x32xf32>,
    } else {
    }
    return
  }
  func.func @transform_0(%arg0: i32, %arg1: i32) -> (i32, i32, i32) {
    %c0_i32 = arith.constant 0 : i32
    %c0_i32_0 = arith.constant 0 : i32
    return %arg0, %arg1, %c0_i32 : i32, i32, i32
  }
  func.func @transform_1(%arg0: i32, %arg1: i32) -> (i32, i32) {
    %c0_i32 = arith.constant 0 : i32
    %c0_i32_0 = arith.constant 0 : i32
    %c0_i32_1 = arith.constant 0 : i32
    return %c0_i32, %c0_i32_0 : i32, i32
  }
  func.func @transform_2(%arg0: i32, %arg1: i32) -> (i32, i32) {
    %c0_i32 = arith.constant 0 : i32
    %c0_i32_0 = arith.constant 0 : i32
    %c0_i32_1 = arith.constant 0 : i32
    return %c0_i32, %c0_i32_0 : i32, i32
  }
  func.func @transform_3(%arg0: i32, %arg1: i32) -> (i32, i32) {
    %c0_i32 = arith.constant 0 : i32
    %c0_i32_0 = arith.constant 0 : i32
    return %arg0, %c0_i32 : i32, i32
  }
}

</mosaic_0001>

<llo_original>
// kernel: tpu_custom_call.1
$region0: #{tpu_custom_call.1}
  #allocation0 [shape = 'u32[]', space=smem, size = 0x4, offset = 0x4, fixed_abs, tag = 'smem constant byte address 0x4 - core index']
  #allocation1 [shape = 'u32[144,128]{1,0:T(1,128)}', space=vmem, size = 0x12000, scoped, tag = 'internal scratch']
  #allocation2 [shape = 'f32[8,32]{1,0:T(8,128)}', space=vmem, size = 0x1000, scoped, tag = 'scratch operand']
  %s0 = inlined_call_operand.hbm [shape: f32[16,8,32], index: 0, kind: input, shape index: {}]
  %s1 = inlined_call_operand.vmem [shape: f32[1,32], index: 1, kind: input, shape index: {}]
  %s2 = inlined_call_operand.vmem [shape: f32[1,32], index: 2, kind: input, shape index: {}]
  %s3 = inlined_call_operand.hbm [shape: f32[16,32], index: 3, kind: output, shape index: {}]
  %s4 = sld [smem:[#allocation0]]
  $region57: #{tpu_custom_call.1} parent=0
    _
  %s6 = ssub.s32 1, %s4
  %s7 = scalar_select 0, %s6, %s4
  $region1: #{tpu_custom_call.1} parent=0
    #allocation3 [shape = 'u8[65536]{0}', space=vmem, size = 0x10000, scoped, tag = 'input window, operand 0']
    #allocation4 [shape = 's32[2]{0}', space=sflag, size = 0x8, scoped, tag = 'scoped memory for tpu_custom_call.1']
    #allocation5 [shape = 's32[2]{0}', space=sflag, size = 0x8, scoped, tag = 'scoped memory for tpu_custom_call.1']
    #allocation6 [shape = 'u8[8192]{0}', space=vmem, size = 0x2000, scoped, tag = 'output window, operand 0']
    %8 = vsyncpa [#allocation4], 0
    %s9 = scalar_lea.sflag [#allocation4], 1
    %10 = vsyncpa %s9, 0
    %11 = vsyncpa [#allocation5], 0
    %s12 = scalar_lea.sflag [#allocation5], 1
    %13 = vsyncpa %s12, 0
    loop: start=0, step=1, limit=4
    $region2: #{tpu_custom_call.1} parent=1 // loop_pre_header
      _
    $region3: #{tpu_custom_call.1} parent=1 // loop_header
      %s15 = sphi 0, %s19
      %p16 = scmp.ge.s32.totalorder %s15, 4
      %s22 = sphi 0, %s34
      %s23 = sphi 0, %s30
      %s24 = sphi 0, %s22
      %s25 = sphi 0, %s23
      %s26 = sphi 0, %s24
      %s27 = sphi 0, %s25
      %s39 = sphi 0, %s41
      %s42 = sphi 0, %s39
      %s43 = sphi 0, %s42
      %s59 = sphi 0, %s43
      %s63 = sphi 0, %s63
      %s65 = sphi 0, %s63
      %s66 = sphi 0, %s65
      %s80 = sphi 0, %s66
      %s84 = sphi 0, %s84
      %s86 = sphi 0, %s84
      %s87 = sphi 0, %s86
      %s101 = sphi 0, %s87
      %s107 = sphi 0, %s109
      %s110 = sphi 0, %s107
      %s111 = sphi 0, %s110
      %s127 = sphi 0, %s111
    $region4: #{tpu_custom_call.1} parent=1 // loop_header_branch
      %18 = sbr.rel (%p16) target = $region8
    $region5: #{tpu_custom_call.1} parent=1 // loop_body
      %s20 = ssub.s32 %s15, 1
      %s21 = ssub.s32 %s15, 2
      %s28 = sadd.s32 1, %s23
      %p29 = scmp.ge.s32.totalorder %s28, 1
      %s30 = scalar_select %p29, 0, %s28
      %s31 = sadd.s32 1, %s22
      %s32 = scalar_select %p29, %s31, %s22
      %p33 = scmp.ge.s32.totalorder %s32, 2
      %s34 = scalar_select %p33, 0, %s32
      %s35 = ssub.s32 %s22, %s34
      %s36 = ssub.s32 %s23, %s30
      %s37 = sor.u32 %s35, %s36
      %p38 = scmp.eq.s32.totalorder %s37, 0
      %s40 = sadd.s32 %s39, 1
      %s41 = scalar_select %p38, %s39, %s40
      %p44 = pneg %p38
      %p45 = scmp.eq.s32.totalorder %s15, 1
      %p46 = por %p44, %p45
      %p47 = scmp.ne.s32.totalorder %s39, %s42
      %p48 = scmp.eq.s32.totalorder %s15, 0
      %p49 = por %p47, %p48
      %p50 = scmp.ne.s32.totalorder %s39, %s42
      %p51 = scmp.eq.s32.totalorder %s20, 1
      %p52 = por %p50, %p51
      %p53 = scmp.ne.s32.totalorder %s42, %s43
      %p54 = scmp.eq.s32.totalorder %s20, 0
      %p55 = por %p53, %p54
      %p56 = scmp.ne.s32.totalorder %s42, %s43
      %p57 = scmp.eq.s32.totalorder %s21, 1
      %p58 = por %p56, %p57
      %p60 = scmp.ne.s32.totalorder %s43, %s59
      %p61 = scmp.eq.s32.totalorder %s21, 0
      %p62 = por %p60, %p61
      %s64 = sadd.s32 %s63, 1
      %p67 = scmp.eq.s32.totalorder %s15, 1
      %p68 = scmp.ne.s32.totalorder %s63, %s65
      %p69 = scmp.eq.s32.totalorder %s15, 0
      %p70 = por %p68, %p69
      %p71 = scmp.ne.s32.totalorder %s63, %s65
      %p72 = scmp.eq.s32.totalorder %s20, 1
      %p73 = por %p71, %p72
      %p74 = scmp.ne.s32.totalorder %s65, %s66
      %p75 = scmp.eq.s32.totalorder %s20, 0
      %p76 = por %p74, %p75
      %p77 = scmp.ne.s32.totalorder %s65, %s66
      %p78 = scmp.eq.s32.totalorder %s21, 1
      %p79 = por %p77, %p78
      %p81 = scmp.ne.s32.totalorder %s66, %s80
      %p82 = scmp.eq.s32.totalorder %s21, 0
      %p83 = por %p81, %p82
      %s85 = sadd.s32 %s84, 1
      %p88 = scmp.eq.s32.totalorder %s15, 1
      %p89 = scmp.ne.s32.totalorder %s84, %s86
      %p90 = scmp.eq.s32.totalorder %s15, 0
      %p91 = por %p89, %p90
      %p92 = scmp.ne.s32.totalorder %s84, %s86
      %p93 = scmp.eq.s32.totalorder %s20, 1
      %p94 = por %p92, %p93
      %p95 = scmp.ne.s32.totalorder %s86, %s87
      %p96 = scmp.eq.s32.totalorder %s20, 0
      %p97 = por %p95, %p96
      %p98 = scmp.ne.s32.totalorder %s86, %s87
      %p99 = scmp.eq.s32.totalorder %s21, 1
      %p100 = por %p98, %p99
      %p102 = scmp.ne.s32.totalorder %s87, %s101
      %p103 = scmp.eq.s32.totalorder %s21, 0
      %p104 = por %p102, %p103
      %s105 = ssub.s32 %s22, %s34
      %p106 = scmp.eq.s32.totalorder %s105, 0
      %s108 = sadd.s32 %s107, 1
      %s109 = scalar_select %p106, %s107, %s108
      %p112 = pneg %p106
      %p113 = scmp.eq.s32.totalorder %s15, 1
      %p114 = por %p112, %p113
      %p115 = scmp.ne.s32.totalorder %s107, %s110
      %p116 = scmp.eq.s32.totalorder %s15, 0
      %p117 = por %p115, %p116
      %p118 = scmp.ne.s32.totalorder %s107, %s110
      %p119 = scmp.eq.s32.totalorder %s20, 1
      %p120 = por %p118, %p119
      %p121 = scmp.ne.s32.totalorder %s110, %s111
      %p122 = scmp.eq.s32.totalorder %s20, 0
      %p123 = por %p121, %p122
      %p124 = scmp.ne.s32.totalorder %s110, %s111
      %p125 = scmp.eq.s32.totalorder %s21, 1
      %p126 = por %p124, %p125
      %p128 = scmp.ne.s32.totalorder %s111, %s127
      %p129 = scmp.eq.s32.totalorder %s21, 0
      %p130 = por %p128, %p129
      %p131 = scmp.le.s32.totalorder 1, %s15
      %p132 = scmp.lt.s32.totalorder %s15, 3
      %p133 = pnand %p131, %p132
      %p134 = pneg %p133
      // Predicated region
      $region9: #{tpu_custom_call.1} parent=5 // pred_check
        _
      $region10: #{tpu_custom_call.1} parent=5 // pred_check_branch
        %136 = sbr.rel (%p133) target = $region12
      $region11: #{tpu_custom_call.1} parent=5 // pred_region
        %s137 = ssub.s32 %s15, 1
        // Predicated region
        $region13: #{tpu_custom_call.1} parent=11 // pred_check
          %p138 = pneg %p76
        $region14: #{tpu_custom_call.1} parent=11 // pred_check_branch
          %140 = sbr.rel (%p138) target = $region16
        $region15: #{tpu_custom_call.1} parent=11 // pred_region
          _
        $region16: #{tpu_custom_call.1} parent=11 // pred_fallthru
          _
        // Predicated region
        $region17: #{tpu_custom_call.1} parent=11 // pred_check
          %p141 = pneg %p97
        $region18: #{tpu_custom_call.1} parent=11 // pred_check_branch
          %143 = sbr.rel (%p141) target = $region20
        $region19: #{tpu_custom_call.1} parent=11 // pred_region
          _
        $region20: #{tpu_custom_call.1} parent=11 // pred_fallthru
          _
      $region12: #{tpu_custom_call.1} parent=5 // pred_fallthru
        _
      %p144 = scmp.lt.s32.totalorder %s15, 2
      // Predicated region
      $region21: #{tpu_custom_call.1} parent=5 // pred_check
        %p145 = pneg %p144
      $region22: #{tpu_custom_call.1} parent=5 // pred_check_branch
        %147 = sbr.rel (%p145) target = $region24
      $region23: #{tpu_custom_call.1} parent=5 // pred_region
        // Predicated region
        $region25: #{tpu_custom_call.1} parent=23 // pred_check
          %p148 = pneg %p49
        $region26: #{tpu_custom_call.1} parent=23 // pred_check_branch
          %150 = sbr.rel (%p148) target = $region28
        $region27: #{tpu_custom_call.1} parent=23 // pred_region
          %s151 = sand.u32 %s39, 1
          %s152 = scalar_lea.sflag [#allocation4], %s151
          %s153 = sand.u32 %s39, 1
          %s154 = smul.addr %s153, 64
          %s155 = scalar_lea.vmem [#allocation3], %s154
          %s156 = smul.u32 8, %s22
          %s158 = ssub.s32 1024, 1024
          %159 = vsyncadd %s152, %s158
          %s160 = sadd.s32 %s23, %s156
          %s161 = smul.addr %s160, 128
          %s162 = scalar_lea.hbm %s0, %s161
          %s163 = sshll.u32 %s155, 4
          %s164 = int_to_ptr.vmem [resolvable:$true] %s163
          %169 = dma.hbm_to_vmem [thread:$0]  %s162, 1024, %s164, %s152, 128, 128, 8
        $region28: #{tpu_custom_call.1} parent=23 // pred_fallthru
          _
      $region24: #{tpu_custom_call.1} parent=5 // pred_fallthru
        _
      %p170 = scmp.le.s32.totalorder 1, %s15
      %p171 = scmp.lt.s32.totalorder %s15, 3
      %p172 = pnand %p170, %p171
      %p173 = pneg %p172
      // Predicated region
      $region29: #{tpu_custom_call.1} parent=5 // pred_check
        _
      $region30: #{tpu_custom_call.1} parent=5 // pred_check_branch
        %175 = sbr.rel (%p172) target = $region32
      $region31: #{tpu_custom_call.1} parent=5 // pred_region
        %s176 = ssub.s32 %s15, 1
        %s177 = sand.u32 %s42, 1
        %s178 = scalar_lea.sflag [#allocation4], %s177
        %s179 = sand.u32 %s42, 1
        %s180 = smul.addr %s179, 64
        %s181 = scalar_lea.vmem [#allocation3], %s180
        // Predicated region
        $region33: #{tpu_custom_call.1} parent=31 // pred_check
          %p182 = pneg %p55
        $region34: #{tpu_custom_call.1} parent=31 // pred_check_branch
          %184 = sbr.rel (%p182) target = $region36
        $region35: #{tpu_custom_call.1} parent=31 // pred_region
          %185 = dma.done %s178, 1024
        $region36: #{tpu_custom_call.1} parent=31 // pred_fallthru
          _
        %s186 = sand.u32 %s42, 1
        %s187 = scalar_lea.sflag [#allocation4], %s186
        %s188 = sand.u32 %s42, 1
        %s189 = smul.addr %s188, 64
        %s190 = scalar_lea.vmem [#allocation3], %s189
        %p191 = pneg %p55
        %p192 = pneg %p52
        %p193 = pneg %p76
        %p194 = pneg %p73
        %p195 = pneg %p97
        %p196 = pneg %p94
        %p197 = pneg %p123
        %p198 = pneg %p120
        %s199 = sand.u32 %s110, 1
        %s200 = scalar_lea.sflag [#allocation5], %s199
        %s201 = sand.u32 %s110, 1
        %s202 = smul.addr %s201, 8
        %s203 = scalar_lea.vmem [#allocation6], %s202
        %s204 = smul.u32 8, %s24
        %p205 = scmp.eq.s32.totalorder %s25, 0
        // Predicated region
        $region37: #{tpu_custom_call.1} parent=31 // pred_check
          %p206 = pneg %p205
        $region38: #{tpu_custom_call.1} parent=31 // pred_check_branch
          %208 = sbr.rel (%p206) target = $region40
        $region39: #{tpu_custom_call.1} parent=31 // pred_region
          %vm209 = vcmask 261120
          %210 = vst.msk [vmem:[#allocation2] sm:$0xff] %vm209, 0.0
        $region40: #{tpu_custom_call.1} parent=31 // pred_fallthru
          _
        %v211 = vld [vmem:[#allocation2] sm:$0xff]
        %v212 = vld [vmem:[%s181] sm:$0xff]
        %v213 = vld [vmem:[%s181 + $0x8] sm:$0xff]
        %v214 = vld [vmem:[%s181 + $0x10] sm:$0xff]
        %v215 = vld [vmem:[%s181 + $0x18] sm:$0xff]
        %v216 = vld [vmem:[%s181 + $0x20] sm:$0xff]
        %v217 = vld [vmem:[%s181 + $0x28] sm:$0xff]
        %v218 = vld [vmem:[%s181 + $0x30] sm:$0xff]
        %v219 = vld [vmem:[%s181 + $0x38] sm:$0xff]
        %vm220 = vcmask 261120
        %v221 = vsel %vm220, %v212, 0.0
        %v222 = vrot.slane %v221, 4
        %v223 = vadd.f32 %v221, %v222
        %v224 = vrot.slane %v223, 2
        %v225 = vadd.f32 %v223, %v224
        %v226 = vrot.slane %v225, 1
        %v227 = vadd.f32 %v225, %v226
        %v228 = vsel %vm220, %v213, 0.0
        %v229 = vrot.slane %v228, 4
        %v230 = vadd.f32 %v228, %v229
        %v231 = vrot.slane %v230, 2
        %v232 = vadd.f32 %v230, %v231
        %v233 = vrot.slane %v232, 1
        %v234 = vadd.f32 %v232, %v233
        %v235 = vsel %vm220, %v214, 0.0
        %v236 = vrot.slane %v235, 4
        %v237 = vadd.f32 %v235, %v236
        %v238 = vrot.slane %v237, 2
        %v239 = vadd.f32 %v237, %v238
        %v240 = vrot.slane %v239, 1
        %v241 = vadd.f32 %v239, %v240
        %v242 = vsel %vm220, %v215, 0.0
        %v243 = vrot.slane %v242, 4
        %v244 = vadd.f32 %v242, %v243
        %v245 = vrot.slane %v244, 2
        %v246 = vadd.f32 %v244, %v245
        %v247 = vrot.slane %v246, 1
        %v248 = vadd.f32 %v246, %v247
        %v249 = vsel %vm220, %v216, 0.0
        %v250 = vrot.slane %v249, 4
        %v251 = vadd.f32 %v249, %v250
        %v252 = vrot.slane %v251, 2
        %v253 = vadd.f32 %v251, %v252
        %v254 = vrot.slane %v253, 1
        %v255 = vadd.f32 %v253, %v254
        %v256 = vsel %vm220, %v217, 0.0
        %v257 = vrot.slane %v256, 4
        %v258 = vadd.f32 %v256, %v257
        %v259 = vrot.slane %v258, 2
        %v260 = vadd.f32 %v258, %v259
        %v261 = vrot.slane %v260, 1
        %v262 = vadd.f32 %v260, %v261
        %v263 = vsel %vm220, %v218, 0.0
        %v264 = vrot.slane %v263, 4
        %v265 = vadd.f32 %v263, %v264
        %v266 = vrot.slane %v265, 2
        %v267 = vadd.f32 %v265, %v266
        %v268 = vrot.slane %v267, 1
        %v269 = vadd.f32 %v267, %v268
        %v270 = vsel %vm220, %v219, 0.0
        %v271 = vrot.slane %v270, 4
        %v272 = vadd.f32 %v270, %v271
        %v273 = vrot.slane %v272, 2
        %v274 = vadd.f32 %v272, %v273
        %v275 = vrot.slane %v274, 1
        %v276 = vadd.f32 %v274, %v275
        %vm285 = vcmask 1041409
        %v286 = vsel %vm285, %v234, %v227
        %vm287 = vcmask 1042434
        %v288 = vsel %vm287, %v241, %v286
        %vm289 = vcmask 1043459
        %v290 = vsel %vm289, %v248, %v288
        %vm291 = vcmask 1044484
        %v292 = vsel %vm291, %v255, %v290
        %vm293 = vcmask 1045509
        %v294 = vsel %vm293, %v262, %v292
        %vm295 = vcmask 1046534
        %v296 = vsel %vm295, %v269, %v294
        %vm297 = vcmask 1047559
        %v298 = vsel %vm297, %v276, %v296
        %v300 = vadd.f32 %v211, %v298
        %301 = vst.msk [vmem:[#allocation2] sm:$0xff] %vm220, %v300
        // Predicated region
        $region41: #{tpu_custom_call.1} parent=31 // pred_check
          %p302 = pneg %p205
        $region42: #{tpu_custom_call.1} parent=31 // pred_check_branch
          %304 = sbr.rel (%p302) target = $region44
        $region43: #{tpu_custom_call.1} parent=31 // pred_region
          %v305 = vld [vmem:[#allocation2] sm:$0xff]
          %v306 = vmul.f32 %v305, 0.125
          %v307 = vld [vmem:[%s1] sm:$0x1]
          %v308 = vld [vmem:[%s2] sm:$0x1]
          %v309 = vsel %vm220, %v306, 0.0
          %310 = vadd.xlane.f32.xlu0 %v309
          %v311 = vpop.xlane.xlu0 %310
          %v312 = vrcp.pop 32.0
          %v313 = vmul.f32 %v311, %v312
          %v314 = vsub.f32 %v306, %v313
          %v315 = vmul.f32 %v314, %v314
          %v316 = vsel %vm220, %v315, 0.0
          %317 = vadd.xlane.f32.xlu0 %v316
          %v318 = vpop.xlane.xlu0 %317
          %v319 = vmul.f32 %v318, %v312
          %v320 = vadd.f32 %v319, 1e-12
          %v321 = vrsqrt.pop %v320
          %v322 = vmul.f32 %v314, %v321
          %v324 = vlaneseq
          %v325 = vshrl.u32 %v324, 7
          %v326 = vsub.s32 0, %v325
          %v327 = vrot.slane %v307, %v326
          %v329 = vmul.f32 %v322, %v327
          %v331 = vlaneseq
          %v332 = vshrl.u32 %v331, 7
          %v333 = vsub.s32 0, %v332
          %v334 = vrot.slane %v308, %v333
          %v336 = vadd.f32 %v329, %v334
          %337 = vst.msk [vmem:[%s203] sm:$0xff] %vm220, %v336
        $region44: #{tpu_custom_call.1} parent=31 // pred_fallthru
          _
        %s338 = sand.u32 %s110, 1
        %s339 = scalar_lea.sflag [#allocation5], %s338
        %s340 = sand.u32 %s110, 1
        %s341 = smul.addr %s340, 8
        %s342 = scalar_lea.vmem [#allocation6], %s341
        // Predicated region
        $region45: #{tpu_custom_call.1} parent=31 // pred_check
          %p343 = pneg %p120
        $region46: #{tpu_custom_call.1} parent=31 // pred_check_branch
          %345 = sbr.rel (%p343) target = $region48
        $region47: #{tpu_custom_call.1} parent=31 // pred_region
          %s347 = ssub.s32 128, 128
          %348 = vsyncadd %s339, %s347
          %s349 = smul.addr %s24, 128
          %s350 = scalar_lea.hbm %s3, %s349
          %s352 = sshll.u32 %s342, 4
          %s353 = int_to_ptr.vmem [resolvable:$true] %s352
          %355 = dma.vmem_to_hbm [thread:$0]  %s353, 128, %s350, %s339
        $region48: #{tpu_custom_call.1} parent=31 // pred_fallthru
          _
      $region32: #{tpu_custom_call.1} parent=5 // pred_fallthru
        _
      %p356 = scmp.le.s32.totalorder 2, %s15
      // Predicated region
      $region49: #{tpu_custom_call.1} parent=5 // pred_check
        %p357 = pneg %p356
      $region50: #{tpu_custom_call.1} parent=5 // pred_check_branch
        %359 = sbr.rel (%p357) target = $region52
      $region51: #{tpu_custom_call.1} parent=5 // pred_region
        %s360 = ssub.s32 %s15, 2
        // Predicated region
        $region53: #{tpu_custom_call.1} parent=51 // pred_check
          %p361 = pneg %p126
        $region54: #{tpu_custom_call.1} parent=51 // pred_check_branch
          %363 = sbr.rel (%p361) target = $region56
        $region55: #{tpu_custom_call.1} parent=51 // pred_region
          %s364 = sand.u32 %s111, 1
          %s365 = scalar_lea.sflag [#allocation5], %s364
          %s366 = sand.u32 %s111, 1
          %s367 = smul.addr %s366, 8
          %s368 = scalar_lea.vmem [#allocation6], %s367
          %369 = dma.done %s365, 128
        $region56: #{tpu_custom_call.1} parent=51 // pred_fallthru
          _
      $region52: #{tpu_custom_call.1} parent=5 // pred_fallthru
        _
    $region6: #{tpu_custom_call.1} parent=1 // loop_footer
      %s19 = sadd.s32 1, %s15
    $region7: #{tpu_custom_call.1} parent=1 // loop_footer_branch
      %14 = sbr.rel target = $region3
    $region8: #{tpu_custom_call.1} parent=1 // loop_exit
      _
    %370 = vsyncpa [#allocation4], 1
    %s371 = scalar_lea.sflag [#allocation4], 1
    %372 = vsyncpa %s371, 1
    %373 = vsyncpa [#allocation5], 1
    %s374 = scalar_lea.sflag [#allocation5], 1
    %375 = vsyncpa %s374, 1

</llo_original>
